<compile_context>
chip_gen: v5e
topology: v5e:2x2
jax: 0.10.0
libtpu: 0.0.40
codegen_flags: <defaults>
</compile_context>

<pallas_src>
import numpy as np
import jax
import jax.numpy as jnp
from jax.experimental import pallas as pl
from jax.experimental.pallas import tpu as pltpu

# Standard JPEG chroma quantization table (deterministic "parameter" init).
_C_TABLE = np.array(
    [
        [17, 18, 24, 47, 99, 99, 99, 99],
        [18, 21, 26, 66, 99, 99, 99, 99],
        [24, 26, 56, 99, 99, 99, 99, 99],
        [47, 66, 99, 99, 99, 99, 99, 99],
        [99, 99, 99, 99, 99, 99, 99, 99],
        [99, 99, 99, 99, 99, 99, 99, 99],
        [99, 99, 99, 99, 99, 99, 99, 99],
        [99, 99, 99, 99, 99, 99, 99, 99],
    ],
    dtype=np.float32,
)

_LANE_CANDIDATES = (512, 1024, 2048, 256, 128)   # prefer 512 (85%+ of roofline)
_TARGET_TILE_BYTES = 1 << 20                     # ~1 MiB per x tile
_MIN_PALLAS_ELEMENTS = 16 * 1024                 # below this, kernel launch dominates


def _pick_lane_width(total_per_batch: int):
    for L in _LANE_CANDIDATES:
        if total_per_batch % L == 0:
            return L
    return None


def _pick_row_tile(R: int, L: int, itemsize: int) -> int:
    target_rows = max(8, _TARGET_TILE_BYTES // (L * itemsize))
    if R <= target_rows:
        return R                       # full extent -> always layout-legal
    return max(8, (target_rows // 8) * 8)


def _cdq_scaled_kernel(x_ref, t_ref, o_ref):
    # x_ref: (1, R_TILE, L) VMEM; t_ref: (1, L) pre-scaled lane-dense table row.
    o_ref[...] = x_ref[...] * t_ref[...]


def _cdq_batched_kernel(factor_ref, x_ref, t_ref, o_ref):
    # factor_ref: SMEM (B,) scalar-prefetched per-batch factor.
    b = pl.program_id(0)
    o_ref[...] = x_ref[...] * (t_ref[...] * factor_ref[b])


def c_dequantize(x, factor, c_table=_C_TABLE):
    """x: (B, N, 8, 8); factor: python scalar, 0-d array, or (B,) array."""
    B, N, H, W = x.shape
    assert (H, W) == (8, 8), "DCT blocks must be 8x8"
    c = jnp.asarray(c_table, dtype=x.dtype)
    scalar_factor = np.ndim(factor) == 0

    total_per_batch = N * H * W
    L = _pick_lane_width(total_per_batch)
    tiny = (B * total_per_batch) < _MIN_PALLAS_ELEMENTS

    if L is None or tiny:
        # Fallback: too small (or not 128-alignable) for a standalone kernel;
        # plain XLA expression is cheaper than a pallas_call here.
        if scalar_factor:
            return x * (c * jnp.asarray(factor, dtype=x.dtype))
        f = jnp.asarray(factor, dtype=x.dtype).reshape(B, 1, 1, 1)
        return x * (c[None, None] * f)

    R = total_per_batch // L
    R_TILE = _pick_row_tile(R, L, x.dtype.itemsize)
    num_r_tiles = pl.cdiv(R, R_TILE)

    # Metadata-only reshapes: (B, N, 8, 8) row-major == (B, R, L) row-major.
    x_flat = x.reshape(B, R, L)
    # Lane-dense table row: the 64-entry zig of c_table repeated L // 64 times.
    t_row = jnp.tile(c.reshape(-1), L // (H * W)).reshape(1, L)

    compiler_params = pltpu.CompilerParams(
        dimension_semantics=("parallel", "parallel"),
    )
    x_block = pl.BlockSpec
    out_shape = jax.ShapeDtypeStruct((B, R, L), x.dtype)

    if scalar_factor:
        # Fold the scalar factor into the table in the wrapper (no SMEM read).
        t_scaled = t_row * jnp.asarray(factor, dtype=x.dtype)
        grid_spec = pltpu.PrefetchScalarGridSpec(
            num_scalar_prefetch=0,
            grid=(B, num_r_tiles),
            in_specs=[
                pl.BlockSpec((1, R_TILE, L), lambda b, r: (b, r, 0)),
                pl.BlockSpec((1, L), lambda b, r: (0, 0)),
            ],
            out_specs=pl.BlockSpec((1, R_TILE, L), lambda b, r: (b, r, 0)),
        )
        out_flat = pl.pallas_call(
            _cdq_scaled_kernel,
            out_shape=out_shape,
            grid_spec=grid_spec,
            compiler_params=compiler_params,
        )(x_flat, t_scaled)
    else:
        factor_vec = jnp.asarray(factor, dtype=x.dtype).reshape(B)
        grid_spec = pltpu.PrefetchScalarGridSpec(
            num_scalar_prefetch=1,          # factor_vec -> SMEM
            grid=(B, num_r_tiles),
            in_specs=[
                pl.BlockSpec((1, R_TILE, L), lambda b, r, f: (b, r, 0)),
                pl.BlockSpec((1, L), lambda b, r, f: (0, 0)),
            ],
            out_specs=pl.BlockSpec((1, R_TILE, L), lambda b, r, f: (b, r, 0)),
        )
        out_flat = pl.pallas_call(
            _cdq_batched_kernel,
            out_shape=out_shape,
            grid_spec=grid_spec,
            compiler_params=compiler_params,
        )(factor_vec, x_flat, t_row)

    return out_flat.reshape(B, N, H, W)


if __name__ == "__main__":
    key = jax.random.PRNGKey(0)
    # 2 images, 256 DCT blocks each (a 128x128 chroma plane) -> Pallas path.
    B, N = 2, 256
    kx, kf = jax.random.split(key)
    x = jax.random.normal(kx, (B, N, 8, 8), dtype=jnp.float32)
    c = jnp.asarray(_C_TABLE)

    # Case 1: scalar factor (table pre-scaled in wrapper).
    out_scalar = c_dequantize(x, 2.0)
    jax.block_until_ready(out_scalar)
    ref_scalar = x * (c * 2.0)
    assert jnp.allclose(out_scalar, ref_scalar, rtol=1e-6, atol=1e-6)

    # Case 2: per-batch factor of shape (B,) (scalar-prefetched in SMEM).
    factor = jax.random.uniform(kf, (B,), dtype=jnp.float32, minval=0.5, maxval=2.0)
    out_batch = c_dequantize(x, factor)
    jax.block_until_ready(out_batch)
    ref_batch = x * (c[None, None] * factor[:, None, None, None])
    assert jnp.allclose(out_batch, ref_batch, rtol=1e-6, atol=1e-6)

    # Case 3: tiny input takes the XLA bypass path (launch overhead dominates).
    x_small = jax.random.normal(kx, (2, 4, 8, 8), dtype=jnp.float32)
    out_tiny = c_dequantize(x_small, factor)
    jax.block_until_ready(out_tiny)
    ref_tiny = x_small * (c[None, None] * factor[:, None, None, None])
    assert jnp.allclose(out_tiny, ref_tiny, rtol=1e-6, atol=1e-6)

    print("KERNEL_OK")
</pallas_src>

<mosaic_0001>
module attributes {stable_mosaic.version = 11 : i64} {
  func.func @_cdq_scaled_kernel(%arg0: i32, %arg1: i32, %arg2: memref<1x32x512xf32, #tpu.memory_space<vmem>>, %arg3: memref<1x512xf32, #tpu.memory_space<vmem>>, %arg4: memref<1x32x512xf32, #tpu.memory_space<vmem>>) attributes {dimension_semantics = [#tpu.dimension_semantics<parallel>, #tpu.dimension_semantics<parallel>], iteration_bounds = array<i64: 2, 1>, scalar_prefetch = 0 : i64, scratch_operands = 0 : i64, tpu.core_type = #tpu.core_type<tc>, window_params = [{transform_indices = @transform_0, window_bounds = array<i64: 1, 32, 512>}, {pipeline_mode = #tpu.pipeline_mode<synchronous>, transform_indices = @transform_1, window_bounds = array<i64: 1, 512>}, {transform_indices = @transform_2, window_bounds = array<i64: 1, 32, 512>}]} {
    %c0 = arith.constant 0 : index
    %c0_0 = arith.constant 0 : index
    %c0_1 = arith.constant 0 : index
    %0 = vector.load %arg2[%c0, %c0_0, %c0_1] : memref<1x32x512xf32, #tpu.memory_space<vmem>>, vector<1x32x512xf32>
    %c0_2 = arith.constant 0 : index
    %c0_3 = arith.constant 0 : index
    %1 = vector.load %arg3[%c0_2, %c0_3] : memref<1x512xf32, #tpu.memory_space<vmem>>, vector<1x512xf32>
    %2 = vector.shape_cast %1 : vector<1x512xf32> to vector<1x1x512xf32>
    %3 = vector.broadcast %2 : vector<1x1x512xf32> to vector<1x32x512xf32>
    %4 = arith.mulf %0, %3 : vector<1x32x512xf32>
    %c0_4 = arith.constant 0 : index
    %c0_5 = arith.constant 0 : index
    %c0_6 = arith.constant 0 : index
    %5 = vector.load %arg4[%c0_4, %c0_5, %c0_6] : memref<1x32x512xf32, #tpu.memory_space<vmem>>, vector<1x32x512xf32>
    tpu.vector_store %arg4[%c0_4, %c0_5, %c0_6], %4 {strides = array<i32>} : memref<1x32x512xf32, #tpu.memory_space<vmem>>, vector<1x32x512xf32>,
    return
  }
  func.func @transform_0(%arg0: i32, %arg1: i32) -> (i32, i32, i32) {
    %c0_i32 = arith.constant 0 : i32
    %c0_i32_0 = arith.constant 0 : i32
    return %arg0, %arg1, %c0_i32 : i32, i32, i32
  }
  func.func @transform_1(%arg0: i32, %arg1: i32) -> (i32, i32) {
    %c0_i32 = arith.constant 0 : i32
    %c0_i32_0 = arith.constant 0 : i32
    %c0_i32_1 = arith.constant 0 : i32
    return %c0_i32, %c0_i32_0 : i32, i32
  }
  func.func @transform_2(%arg0: i32, %arg1: i32) -> (i32, i32, i32) {
    %c0_i32 = arith.constant 0 : i32
    %c0_i32_0 = arith.constant 0 : i32
    return %arg0, %arg1, %c0_i32 : i32, i32, i32
  }
}

</mosaic_0001>

<llo_original>
// kernel: tpu_custom_call.1
$region0: #{tpu_custom_call.1}
  #allocation0 [shape = 'u32[]', space=smem, size = 0x4, offset = 0x4, fixed_abs, tag = 'smem constant byte address 0x4 - core index']
  #allocation1 [shape = 'u32[72,128]{1,0:T(1,128)}', space=vmem, size = 0x9000, scoped, tag = 'internal scratch']
  %s0 = inlined_call_operand.hbm [shape: f32[2,32,512], index: 0, kind: input, shape index: {}]
  %s1 = inlined_call_operand.hbm [shape: f32[1,512], index: 1, kind: input, shape index: {}]
  %s2 = inlined_call_operand.hbm [shape: f32[2,32,512], index: 2, kind: output, shape index: {}]
  %s3 = sld [smem:[#allocation0]]
  $region49: #{tpu_custom_call.1} parent=0
    _
  %s5 = ssub.s32 1, %s3
  %s6 = scalar_select 0, %s5, %s3
  $region1: #{tpu_custom_call.1} parent=0
    #allocation2 [shape = 'u8[131072]{0}', space=vmem, size = 0x20000, scoped, tag = 'input window, operand 0']
    #allocation3 [shape = 's32[2]{0}', space=sflag, size = 0x8, scoped, tag = 'scoped memory for tpu_custom_call.1']
    #allocation4 [shape = 's32[2]{0}', space=sflag, size = 0x8, scoped, tag = 'scoped memory for tpu_custom_call.1']
    #allocation5 [shape = 'u8[2048]{0}', space=vmem, size = 0x800, scoped, tag = 'input window, operand 1, single buffered']
    #allocation6 [shape = 's32[1]{0}', space=sflag, size = 0x4, scoped, tag = 'scoped memory for tpu_custom_call.1']
    #allocation7 [shape = 'u8[131072]{0}', space=vmem, size = 0x20000, scoped, tag = 'output window, operand 0']
    %7 = vsyncpa [#allocation3], 0
    %s8 = scalar_lea.sflag [#allocation3], 1
    %9 = vsyncpa %s8, 0
    %10 = vsyncpa [#allocation6], 0
    %11 = vsyncpa [#allocation4], 0
    %s12 = scalar_lea.sflag [#allocation4], 1
    %13 = vsyncpa %s12, 0
    loop: start=0, step=1, limit=4
    $region2: #{tpu_custom_call.1} parent=1 // loop_pre_header
      _
    $region3: #{tpu_custom_call.1} parent=1 // loop_header
      %s15 = sphi 0, %s19
      %p16 = scmp.ge.s32.totalorder %s15, 4
      %s22 = sphi 0, %s34
      %s23 = sphi 0, %s30
      %s24 = sphi 0, %s22
      %s25 = sphi 0, %s23
      %s26 = sphi 0, %s24
      %s27 = sphi 0, %s25
      %s39 = sphi 0, %s41
      %s42 = sphi 0, %s39
      %s43 = sphi 0, %s42
      %s59 = sphi 0, %s43
      %s63 = sphi 0, %s63
      %s65 = sphi 0, %s63
      %s66 = sphi 0, %s65
      %s80 = sphi 0, %s66
      %s88 = sphi 0, %s90
      %s91 = sphi 0, %s88
      %s92 = sphi 0, %s91
      %s108 = sphi 0, %s92
    $region4: #{tpu_custom_call.1} parent=1 // loop_header_branch
      %18 = sbr.rel (%p16) target = $region8
    $region5: #{tpu_custom_call.1} parent=1 // loop_body
      %s20 = ssub.s32 %s15, 1
      %s21 = ssub.s32 %s15, 2
      %s28 = sadd.s32 1, %s23
      %p29 = scmp.ge.s32.totalorder %s28, 1
      %s30 = scalar_select %p29, 0, %s28
      %s31 = sadd.s32 1, %s22
      %s32 = scalar_select %p29, %s31, %s22
      %p33 = scmp.ge.s32.totalorder %s32, 2
      %s34 = scalar_select %p33, 0, %s32
      %s35 = ssub.s32 %s22, %s34
      %s36 = ssub.s32 %s23, %s30
      %s37 = sor.u32 %s35, %s36
      %p38 = scmp.eq.s32.totalorder %s37, 0
      %s40 = sadd.s32 %s39, 1
      %s41 = scalar_select %p38, %s39, %s40
      %p44 = pneg %p38
      %p45 = scmp.eq.s32.totalorder %s15, 1
      %p46 = por %p44, %p45
      %p47 = scmp.ne.s32.totalorder %s39, %s42
      %p48 = scmp.eq.s32.totalorder %s15, 0
      %p49 = por %p47, %p48
      %p50 = scmp.ne.s32.totalorder %s39, %s42
      %p51 = scmp.eq.s32.totalorder %s20, 1
      %p52 = por %p50, %p51
      %p53 = scmp.ne.s32.totalorder %s42, %s43
      %p54 = scmp.eq.s32.totalorder %s20, 0
      %p55 = por %p53, %p54
      %p56 = scmp.ne.s32.totalorder %s42, %s43
      %p57 = scmp.eq.s32.totalorder %s21, 1
      %p58 = por %p56, %p57
      %p60 = scmp.ne.s32.totalorder %s43, %s59
      %p61 = scmp.eq.s32.totalorder %s21, 0
      %p62 = por %p60, %p61
      %s64 = sadd.s32 %s63, 1
      %p67 = scmp.eq.s32.totalorder %s15, 1
      %p68 = scmp.ne.s32.totalorder %s63, %s65
      %p69 = scmp.eq.s32.totalorder %s15, 0
      %p70 = por %p68, %p69
      %p71 = scmp.ne.s32.totalorder %s63, %s65
      %p72 = scmp.eq.s32.totalorder %s20, 1
      %p73 = por %p71, %p72
      %p74 = scmp.ne.s32.totalorder %s65, %s66
      %p75 = scmp.eq.s32.totalorder %s20, 0
      %p76 = por %p74, %p75
      %p77 = scmp.ne.s32.totalorder %s65, %s66
      %p78 = scmp.eq.s32.totalorder %s21, 1
      %p79 = por %p77, %p78
      %p81 = scmp.ne.s32.totalorder %s66, %s80
      %p82 = scmp.eq.s32.totalorder %s21, 0
      %p83 = por %p81, %p82
      %s84 = ssub.s32 %s22, %s34
      %s85 = ssub.s32 %s23, %s30
      %s86 = sor.u32 %s84, %s85
      %p87 = scmp.eq.s32.totalorder %s86, 0
      %s89 = sadd.s32 %s88, 1
      %s90 = scalar_select %p87, %s88, %s89
      %p93 = pneg %p87
      %p94 = scmp.eq.s32.totalorder %s15, 1
      %p95 = por %p93, %p94
      %p96 = scmp.ne.s32.totalorder %s88, %s91
      %p97 = scmp.eq.s32.totalorder %s15, 0
      %p98 = por %p96, %p97
      %p99 = scmp.ne.s32.totalorder %s88, %s91
      %p100 = scmp.eq.s32.totalorder %s20, 1
      %p101 = por %p99, %p100
      %p102 = scmp.ne.s32.totalorder %s91, %s92
      %p103 = scmp.eq.s32.totalorder %s20, 0
      %p104 = por %p102, %p103
      %p105 = scmp.ne.s32.totalorder %s91, %s92
      %p106 = scmp.eq.s32.totalorder %s21, 1
      %p107 = por %p105, %p106
      %p109 = scmp.ne.s32.totalorder %s92, %s108
      %p110 = scmp.eq.s32.totalorder %s21, 0
      %p111 = por %p109, %p110
      %p112 = scmp.le.s32.totalorder 1, %s15
      %p113 = scmp.lt.s32.totalorder %s15, 3
      %p114 = pnand %p112, %p113
      %p115 = pneg %p114
      // Predicated region
      $region9: #{tpu_custom_call.1} parent=5 // pred_check
        _
      $region10: #{tpu_custom_call.1} parent=5 // pred_check_branch
        %117 = sbr.rel (%p114) target = $region12
      $region11: #{tpu_custom_call.1} parent=5 // pred_region
        %s118 = ssub.s32 %s15, 1
        // Predicated region
        $region13: #{tpu_custom_call.1} parent=11 // pred_check
          %p119 = pneg %p76
        $region14: #{tpu_custom_call.1} parent=11 // pred_check_branch
          %121 = sbr.rel (%p119) target = $region16
        $region15: #{tpu_custom_call.1} parent=11 // pred_region
          %123 = vsyncadd [#allocation6], 0
          %s125 = sshll.u32 %s1, 4
          %s126 = int_to_ptr.hbm [resolvable:$true] %s125
          %s127 = sshll.u32 [#allocation5], 4
          %s128 = int_to_ptr.vmem [resolvable:$true] %s127
          %130 = dma.hbm_to_vmem [thread:$0]  %s126, 64, %s128, [#allocation6]
        $region16: #{tpu_custom_call.1} parent=11 // pred_fallthru
          _
      $region12: #{tpu_custom_call.1} parent=5 // pred_fallthru
        _
      %p131 = scmp.lt.s32.totalorder %s15, 2
      // Predicated region
      $region17: #{tpu_custom_call.1} parent=5 // pred_check
        %p132 = pneg %p131
      $region18: #{tpu_custom_call.1} parent=5 // pred_check_branch
        %134 = sbr.rel (%p132) target = $region20
      $region19: #{tpu_custom_call.1} parent=5 // pred_region
        // Predicated region
        $region21: #{tpu_custom_call.1} parent=19 // pred_check
          %p135 = pneg %p49
        $region22: #{tpu_custom_call.1} parent=19 // pred_check_branch
          %137 = sbr.rel (%p135) target = $region24
        $region23: #{tpu_custom_call.1} parent=19 // pred_region
          %s138 = sand.u32 %s39, 1
          %s139 = scalar_lea.sflag [#allocation3], %s138
          %s140 = sand.u32 %s39, 1
          %s141 = smul.addr %s140, 128
          %s142 = scalar_lea.vmem [#allocation2], %s141
          %s143 = smul.u32 4, %s23
          %145 = vsyncadd %s139, 0
          %s146 = smul.addr %s143, 4
          %s147 = smul.addr %s22, 16
          %s148 = sadd.s32 %s146, %s147
          %s149 = smul.addr %s148, 8
          %s150 = scalar_lea.hbm %s0, %s149
          %s151 = sshll.u32 %s150, 4
          %s152 = int_to_ptr.hbm [resolvable:$true] %s151
          %s153 = sshll.u32 %s142, 4
          %s154 = int_to_ptr.vmem [resolvable:$true] %s153
          %159 = dma.hbm_to_vmem [thread:$0]  %s152, 2048, %s154, %s139, 512, 512, 32
        $region24: #{tpu_custom_call.1} parent=19 // pred_fallthru
          _
      $region20: #{tpu_custom_call.1} parent=5 // pred_fallthru
        _
      %p160 = scmp.le.s32.totalorder 1, %s15
      %p161 = scmp.lt.s32.totalorder %s15, 3
      %p162 = pnand %p160, %p161
      %p163 = pneg %p162
      // Predicated region
      $region25: #{tpu_custom_call.1} parent=5 // pred_check
        _
      $region26: #{tpu_custom_call.1} parent=5 // pred_check_branch
        %165 = sbr.rel (%p162) target = $region28
      $region27: #{tpu_custom_call.1} parent=5 // pred_region
        %s166 = ssub.s32 %s15, 1
        %s167 = sand.u32 %s42, 1
        %s168 = scalar_lea.sflag [#allocation3], %s167
        %s169 = sand.u32 %s42, 1
        %s170 = smul.addr %s169, 128
        %s171 = scalar_lea.vmem [#allocation2], %s170
        // Predicated region
        $region29: #{tpu_custom_call.1} parent=27 // pred_check
          %p172 = pneg %p55
        $region30: #{tpu_custom_call.1} parent=27 // pred_check_branch
          %174 = sbr.rel (%p172) target = $region32
        $region31: #{tpu_custom_call.1} parent=27 // pred_region
          %176 = dma.done %s168, 2048
        $region32: #{tpu_custom_call.1} parent=27 // pred_fallthru
          _
        // Predicated region
        $region33: #{tpu_custom_call.1} parent=27 // pred_check
          %p177 = pneg %p76
        $region34: #{tpu_custom_call.1} parent=27 // pred_check_branch
          %179 = sbr.rel (%p177) target = $region36
        $region35: #{tpu_custom_call.1} parent=27 // pred_region
          %181 = dma.done [#allocation6], 64
        $region36: #{tpu_custom_call.1} parent=27 // pred_fallthru
          _
        %s182 = sand.u32 %s42, 1
        %s183 = scalar_lea.sflag [#allocation3], %s182
        %s184 = sand.u32 %s42, 1
        %s185 = smul.addr %s184, 128
        %s186 = scalar_lea.vmem [#allocation2], %s185
        %p187 = pneg %p55
        %p188 = pneg %p52
        %p189 = pneg %p76
        %p190 = pneg %p73
        %p191 = pneg %p104
        %p192 = pneg %p101
        %s193 = sand.u32 %s91, 1
        %s194 = scalar_lea.sflag [#allocation4], %s193
        %s195 = sand.u32 %s91, 1
        %s196 = smul.addr %s195, 128
        %s197 = scalar_lea.vmem [#allocation7], %s196
        %s198 = smul.u32 4, %s25
        %s199 = smul.u32 4, %s25
        %v200 = vld [vmem:[%s171] sm:$0xff]
        %v201 = vld [vmem:[%s171 + $0x8] sm:$0xff]
        %v202 = vld [vmem:[%s171 + $0x10] sm:$0xff]
        %v203 = vld [vmem:[%s171 + $0x18] sm:$0xff]
        %v204 = vld [vmem:[%s171 + $0x20] sm:$0xff]
        %v205 = vld [vmem:[%s171 + $0x28] sm:$0xff]
        %v206 = vld [vmem:[%s171 + $0x30] sm:$0xff]
        %v207 = vld [vmem:[%s171 + $0x38] sm:$0xff]
        %v208 = vld [vmem:[%s171 + $0x40] sm:$0xff]
        %v209 = vld [vmem:[%s171 + $0x48] sm:$0xff]
        %v210 = vld [vmem:[%s171 + $0x50] sm:$0xff]
        %v211 = vld [vmem:[%s171 + $0x58] sm:$0xff]
        %v212 = vld [vmem:[%s171 + $0x60] sm:$0xff]
        %v213 = vld [vmem:[%s171 + $0x68] sm:$0xff]
        %v214 = vld [vmem:[%s171 + $0x70] sm:$0xff]
        %v215 = vld [vmem:[%s171 + $0x78] sm:$0xff]
        %v216 = vld [vmem:[#allocation5] sm:$0xf]
        %v218 = vperm.slane %v216, 0
        %v219 = vperm.slane %v216, 1
        %v220 = vperm.slane %v216, 2
        %v221 = vperm.slane %v216, 3
        %v226 = vmul.f32 %v200, %v218
        %v227 = vmul.f32 %v201, %v219
        %v228 = vmul.f32 %v202, %v220
        %v229 = vmul.f32 %v203, %v221
        %v230 = vmul.f32 %v204, %v218
        %v231 = vmul.f32 %v205, %v219
        %v232 = vmul.f32 %v206, %v220
        %v233 = vmul.f32 %v207, %v221
        %v234 = vmul.f32 %v208, %v218
        %v235 = vmul.f32 %v209, %v219
        %v236 = vmul.f32 %v210, %v220
        %v237 = vmul.f32 %v211, %v221
        %v238 = vmul.f32 %v212, %v218
        %v239 = vmul.f32 %v213, %v219
        %v240 = vmul.f32 %v214, %v220
        %v241 = vmul.f32 %v215, %v221
        %242 = vst [vmem:[%s197] sm:$0xff] %v226
        %243 = vst [vmem:[%s197 + $0x8] sm:$0xff] %v227
        %244 = vst [vmem:[%s197 + $0x10] sm:$0xff] %v228
        %245 = vst [vmem:[%s197 + $0x18] sm:$0xff] %v229
        %246 = vst [vmem:[%s197 + $0x20] sm:$0xff] %v230
        %247 = vst [vmem:[%s197 + $0x28] sm:$0xff] %v231
        %248 = vst [vmem:[%s197 + $0x30] sm:$0xff] %v232
        %249 = vst [vmem:[%s197 + $0x38] sm:$0xff] %v233
        %250 = vst [vmem:[%s197 + $0x40] sm:$0xff] %v234
        %251 = vst [vmem:[%s197 + $0x48] sm:$0xff] %v235
        %252 = vst [vmem:[%s197 + $0x50] sm:$0xff] %v236
        %253 = vst [vmem:[%s197 + $0x58] sm:$0xff] %v237
        %254 = vst [vmem:[%s197 + $0x60] sm:$0xff] %v238
        %255 = vst [vmem:[%s197 + $0x68] sm:$0xff] %v239
        %256 = vst [vmem:[%s197 + $0x70] sm:$0xff] %v240
        %257 = vst [vmem:[%s197 + $0x78] sm:$0xff] %v241
        %s258 = sand.u32 %s91, 1
        %s259 = scalar_lea.sflag [#allocation4], %s258
        %s260 = sand.u32 %s91, 1
        %s261 = smul.addr %s260, 128
        %s262 = scalar_lea.vmem [#allocation7], %s261
        // Predicated region
        $region37: #{tpu_custom_call.1} parent=27 // pred_check
          %p263 = pneg %p101
        $region38: #{tpu_custom_call.1} parent=27 // pred_check_branch
          %265 = sbr.rel (%p263) target = $region40
        $region39: #{tpu_custom_call.1} parent=27 // pred_region
          %s266 = smul.u32 4, %s25
          %268 = vsyncadd %s259, 0
          %s269 = smul.addr %s266, 4
          %s270 = smul.addr %s24, 16
          %s271 = sadd.s32 %s269, %s270
          %s272 = smul.addr %s271, 8
          %s273 = scalar_lea.hbm %s2, %s272
          %s274 = sshll.u32 %s262, 4
          %s275 = int_to_ptr.vmem [resolvable:$true] %s274
          %s276 = sshll.u32 %s273, 4
          %s277 = int_to_ptr.hbm [resolvable:$true] %s276
          %282 = dma.vmem_to_hbm [thread:$0]  %s275, 2048, %s277, %s259, 512, 512, 32
        $region40: #{tpu_custom_call.1} parent=27 // pred_fallthru
          _
      $region28: #{tpu_custom_call.1} parent=5 // pred_fallthru
        _
      %p283 = scmp.le.s32.totalorder 2, %s15
      // Predicated region
      $region41: #{tpu_custom_call.1} parent=5 // pred_check
        %p284 = pneg %p283
      $region42: #{tpu_custom_call.1} parent=5 // pred_check_branch
        %286 = sbr.rel (%p284) target = $region44
      $region43: #{tpu_custom_call.1} parent=5 // pred_region
        %s287 = ssub.s32 %s15, 2
        // Predicated region
        $region45: #{tpu_custom_call.1} parent=43 // pred_check
          %p288 = pneg %p107
        $region46: #{tpu_custom_call.1} parent=43 // pred_check_branch
          %290 = sbr.rel (%p288) target = $region48
        $region47: #{tpu_custom_call.1} parent=43 // pred_region
          %s291 = sand.u32 %s92, 1
          %s292 = scalar_lea.sflag [#allocation4], %s291
          %s293 = sand.u32 %s92, 1
          %s294 = smul.addr %s293, 128
          %s295 = scalar_lea.vmem [#allocation7], %s294
          %297 = dma.done %s292, 2048
        $region48: #{tpu_custom_call.1} parent=43 // pred_fallthru
          _
      $region44: #{tpu_custom_call.1} parent=5 // pred_fallthru
        _
    $region6: #{tpu_custom_call.1} parent=1 // loop_footer
      %s19 = sadd.s32 1, %s15
    $region7: #{tpu_custom_call.1} parent=1 // loop_footer_branch
      %14 = sbr.rel target = $region3
    $region8: #{tpu_custom_call.1} parent=1 // loop_exit
      _
    %298 = vsyncpa [#allocation3], 1
    %s299 = scalar_lea.sflag [#allocation3], 1
    %300 = vsyncpa %s299, 1
    %301 = vsyncpa [#allocation6], 1
    %302 = vsyncpa [#allocation4], 1
    %s303 = scalar_lea.sflag [#allocation4], 1
    %304 = vsyncpa %s303, 1

</llo_original>
